<compile_context>
chip_gen: v5e
topology: v5e:2x2
jax: 0.10.0
libtpu: 0.0.40
codegen_flags: <defaults>
</compile_context>

<pallas_src>
import functools

import jax
import jax.numpy as jnp
from jax.experimental import pallas as pl
from jax.experimental.pallas import tpu as pltpu


def _soft_ce_kernel(logits_ref, target_ref, out_ref, *, ignore_index, hw, tile_hw):
    """Per-block partial sums of (nll, smooth) for label-smoothed NLL."""
    logits = logits_ref[...].astype(jnp.float32)     # (BN, C, T)
    tgt = target_ref[...]                            # (BN, 1, T) int32
    C = logits.shape[1]

    # log_softmax pieces along the class (sublane) axis.
    m = jnp.max(logits, axis=1, keepdims=True)       # (BN, 1, T)
    shifted = logits - m                              # (BN, C, T)
    lse = jnp.log(jnp.sum(jnp.exp(shifted), axis=1, keepdims=True))  # (BN, 1, T)

    valid = tgt != ignore_index                       # (BN, 1, T)
    if hw % tile_hw != 0:
        # Mask lane columns past the true spatial extent (last, partial block).
        j = pl.program_id(1)
        col = jax.lax.broadcasted_iota(jnp.int32, tgt.shape, 2) + j * tile_hw
        valid = jnp.logical_and(valid, col < hw)
    tgt_safe = jnp.where(valid, tgt, 0)

    # Gather the target logit via a one-hot select over the class axis
    # (on raw logits: one fewer live (C,T) temporary, better conditioned).
    cls = jax.lax.broadcasted_iota(jnp.int32, logits.shape, 1)        # (BN, C, T)
    gathered = jnp.sum(jnp.where(cls == tgt_safe, logits, 0.0),
                       axis=1, keepdims=True)                         # (BN, 1, T)
    nll = (m + lse) - gathered                        # -log_softmax[target]
    # smooth = -sum_c log_softmax = C*lse - sum_c shifted  (well conditioned).
    smooth = C * lse - jnp.sum(shifted, axis=1, keepdims=True)

    # ignore_index / padded-tail positions contribute zero (jnp.where also
    # kills any NaN/Inf coming from garbage tail columns before the sum).
    nll_sum = jnp.sum(jnp.where(valid, nll, 0.0))
    smooth_sum = jnp.sum(jnp.where(valid, smooth, 0.0))

    # Single writeback per grid step: lanes = [nll_sum, smooth_sum].
    lane = jax.lax.broadcasted_iota(jnp.int32, (1, 1, 1, 2), 3)
    out_ref[...] = jnp.where(lane == 0, nll_sum, smooth_sum)


def _default_vmem_budget_bytes():
    """Budget for the *double-buffered* logits block, per TPU generation."""
    cap = None
    try:
        cap = getattr(pltpu.get_tpu_info(), "vmem_capacity_bytes", None)
    except Exception:  # pragma: no cover - interpret mode / unknown backends
        cap = None
    if not cap:
        cap = 64 * 1024 * 1024  # conservative (v7x-sized) fallback
    # ~1/8 of physical VMEM: 16 MiB on v5e/v6e (128 MiB), 8 MiB on v7x (64 MiB/TC).
    return int(min(16 * 1024 * 1024, max(4 * 1024 * 1024, cap // 8)))


def _largest_divisor_at_most(n, cap):
    best = 1
    for d in range(1, n + 1):
        if n % d == 0 and d <= cap:
            best = d
    return best


def _choose_tiling(n, c, hw, itemsize, vmem_budget_bytes):
    """Pick (bn, tile_hw) so each logits block is ~budget/2 bytes, lane-aligned."""
    per_buffer = max(vmem_budget_bytes // 2, 128 * c * itemsize)   # 2x double-buffer
    col_bytes = c * itemsize
    cap_cols = max(128, (per_buffer // col_bytes) // 128 * 128)

    if hw > cap_cols:
        return 1, cap_cols                      # spatial blocking; tail masked
    # Whole spatial extent fits in one block: block the batch axis so each DMA
    # still moves ~per_buffer bytes instead of a few KiB.
    per_image = max(1, c * hw * itemsize)
    bn = _largest_divisor_at_most(n, max(1, per_buffer // per_image))
    return bn, hw


def soft_cross_entropy_loss(y_pred, y_true, *, smooth_factor,
                            ignore_index=-100, reduction="mean",
                            vmem_budget_bytes=None):
    """y_pred: (N, C, H, W) float; y_true: (N, H, W) int. Returns scalar loss."""
    N, C, H, W = y_pred.shape
    HW = H * W
    itemsize = y_pred.dtype.itemsize
    if vmem_budget_bytes is None:
        vmem_budget_bytes = _default_vmem_budget_bytes()

    bn, tile = _choose_tiling(N, C, HW, itemsize, vmem_budget_bytes)

    # v7x has 2 TensorCores: guarantee the (fully parallel) grid has >= 2 steps.
    if (N // bn) * pl.cdiv(HW, tile) < 2:
        if N >= 2:
            bn = _largest_divisor_at_most(N, N // 2)
        elif HW >= 2 * 128:
            tile = ((((HW + 1) // 2) + 127) // 128) * 128   # 2 blocks, tail masked

    n_bblocks = N // bn
    n_hwblocks = pl.cdiv(HW, tile)

    # Free, contiguous views: NO transpose, NO padding, native dtype kept.
    logits = y_pred.reshape(N, C, HW)
    targets = y_true.reshape(N, 1, HW).astype(jnp.int32)

    ii = -(2 ** 31) if ignore_index is None else int(ignore_index)
    kernel = functools.partial(_soft_ce_kernel, ignore_index=ii,
                               hw=HW, tile_hw=tile)

    # Double-buffered logits + targets + outputs, with headroom.  >= 32 MiB is
    # safe under every generation's physical VMEM (v7x: 64 MiB per TC).
    needed = 2 * (bn * C * tile * itemsize + bn * tile * 4) + 4096
    vmem_limit = int(max(32 * 1024 * 1024, needed + (4 << 20)))

    partials = pl.pallas_call(
        kernel,
        out_shape=jax.ShapeDtypeStruct((n_bblocks, n_hwblocks, 1, 2), jnp.float32),
        grid_spec=pltpu.PrefetchScalarGridSpec(
            num_scalar_prefetch=0,
            grid=(n_bblocks, n_hwblocks),
            in_specs=[
                pl.BlockSpec((bn, C, tile), lambda n, j: (n, 0, j)),
                pl.BlockSpec((bn, 1, tile), lambda n, j: (n, 0, j)),
            ],
            out_specs=pl.BlockSpec((1, 1, 1, 2), lambda n, j: (n, j, 0, 0)),
        ),
        compiler_params=pltpu.CompilerParams(
            dimension_semantics=("parallel", "parallel"),
            vmem_limit_bytes=vmem_limit),
    )(logits, targets)

    nll_sum = jnp.sum(partials[..., 0])
    smooth_sum = jnp.sum(partials[..., 1])

    if reduction == "mean":
        denom = N * HW   # divides by ALL elements (pytorch-toolbelt behaviour)
        nll = nll_sum / denom
        smooth = smooth_sum / denom
    elif reduction == "sum":
        nll = nll_sum
        smooth = smooth_sum
    else:
        # TODO(synk): reduction='none' (per-pixel loss map) not implemented.
        raise NotImplementedError("Only 'mean' and 'sum' reductions supported.")

    eps = smooth_factor
    return (1.0 - eps) * nll + (eps / C) * smooth


def _reference(y_pred, y_true, *, smooth_factor, ignore_index=-100,
               reduction="mean"):
    """Pure-JAX reference mirroring pytorch-toolbelt label_smoothed_nll_loss."""
    C = y_pred.shape[1]
    lprobs = jax.nn.log_softmax(y_pred.astype(jnp.float32), axis=1)
    if ignore_index is None:
        valid = jnp.ones(y_true.shape, dtype=bool)
    else:
        valid = y_true != ignore_index
    tgt = jnp.where(valid, y_true, 0)
    nll = -jnp.take_along_axis(lprobs, tgt[:, None, :, :], axis=1)[:, 0]
    smooth = -jnp.sum(lprobs, axis=1)
    nll = jnp.where(valid, nll, 0.0)
    smooth = jnp.where(valid, smooth, 0.0)
    if reduction == "mean":
        nll, smooth = jnp.mean(nll), jnp.mean(smooth)
    else:
        nll, smooth = jnp.sum(nll), jnp.sum(smooth)
    eps = smooth_factor
    return (1.0 - eps) * nll + (eps / C) * smooth


if __name__ == "__main__":
    key = jax.random.PRNGKey(0)
    keys = jax.random.split(key, 8)

    smooth_factor = 0.1
    ignore_index = -100

    def make(kk, shape, dtype=jnp.float32):
        n, c, h, w = shape
        k1, k2, k3 = jax.random.split(kk, 3)
        yp = jax.random.normal(k1, shape, dtype=jnp.float32).astype(dtype)
        yt = jax.random.randint(k2, (n, h, w), 0, c, dtype=jnp.int32)
        msk = jax.random.uniform(k3, (n, h, w)) < 0.1
        return yp, jnp.where(msk, ignore_index, yt)

    def check(yp, yt, red="mean", tol=1e-5, **kw):
        loss = jax.block_until_ready(soft_cross_entropy_loss(
            yp, yt, smooth_factor=smooth_factor, ignore_index=ignore_index,
            reduction=red, **kw))
        ref = _reference(yp.astype(jnp.float32), yt, smooth_factor=smooth_factor,
                         ignore_index=ignore_index, reduction=red)
        assert jnp.allclose(loss, ref, rtol=tol, atol=tol), (red, loss, ref)

    # case 1: (2,4,16,16) f32 — batch blocking + >=2-parallel-step split, mean/sum.
    yp1, yt1 = make(keys[0], (2, 4, 16, 16))
    check(yp1, yt1, "mean")
    check(yp1, yt1, "sum")

    # case 2: ragged HW + tiny VMEM budget -> spatial blocking + tail iota mask.
    yp2, yt2 = make(keys[1], (2, 4, 16, 10))
    check(yp2, yt2, "mean", vmem_budget_bytes=4096)

    # case 3: (4,4,8,8) -> BN=2 batch blocks (multi-image block path).
    yp3, yt3 = make(keys[2], (4, 4, 8, 8))
    check(yp3, yt3, "mean")

    # case 4: N=1 -> spatial axis split to keep both v7x cores busy (+ tail mask).
    yp4, yt4 = make(keys[3], (1, 4, 20, 20))
    check(yp4, yt4, "mean")

    # case 5: bf16 logits stay bf16 in HBM; kernel upcasts to f32 in VMEM.
    yp5, yt5 = make(keys[4], (2, 4, 16, 16), dtype=jnp.bfloat16)
    check(yp5, yt5, "mean", tol=1e-4)

    print("KERNEL_OK")
</pallas_src>

<mosaic_0001>
module attributes {stable_mosaic.version = 11 : i64} {
  func.func @_soft_ce_kernel(%arg0: i32, %arg1: i32, %arg2: memref<1x4x256xf32, #tpu.memory_space<vmem>>, %arg3: memref<1x1x256xi32, #tpu.memory_space<vmem>>, %arg4: memref<1x1x1x2xf32, #tpu.memory_space<vmem>>) attributes {dimension_semantics = [#tpu.dimension_semantics<parallel>, #tpu.dimension_semantics<parallel>], iteration_bounds = array<i64: 2, 1>, scalar_prefetch = 0 : i64, scratch_operands = 0 : i64, tpu.core_type = #tpu.core_type<tc>, window_params = [{transform_indices = @transform_0, window_bounds = array<i64: 1, 4, 256>}, {transform_indices = @transform_1, window_bounds = array<i64: 1, 1, 256>}, {transform_indices = @transform_2, window_bounds = array<i64: 1, 1, 1, 2>}]} {
    %c0 = arith.constant 0 : index
    %c0_0 = arith.constant 0 : index
    %c0_1 = arith.constant 0 : index
    %0 = vector.load %arg2[%c0, %c0_0, %c0_1] : memref<1x4x256xf32, #tpu.memory_space<vmem>>, vector<1x4x256xf32>
    %c0_2 = arith.constant 0 : index
    %c0_3 = arith.constant 0 : index
    %c0_4 = arith.constant 0 : index
    %1 = vector.load %arg3[%c0_2, %c0_3, %c0_4] : memref<1x1x256xi32, #tpu.memory_space<vmem>>, vector<1x1x256xi32>
    %cst = arith.constant dense<0xFF800000> : vector<1x256xf32>
    %2 = vector.multi_reduction <maximumf>, %0, %cst [1] : vector<1x4x256xf32> to vector<1x256xf32>
    %3 = vector.shape_cast %2 : vector<1x256xf32> to vector<1x1x256xf32>
    %4 = vector.broadcast %3 : vector<1x1x256xf32> to vector<1x4x256xf32>
    %5 = arith.subf %0, %4 : vector<1x4x256xf32>
    %6 = math.exp %5 : vector<1x4x256xf32>
    %cst_5 = arith.constant dense<0.000000e+00> : vector<1x256xf32>
    %7 = vector.multi_reduction <add>, %6, %cst_5 [1] : vector<1x4x256xf32> to vector<1x256xf32>
    %8 = vector.shape_cast %7 : vector<1x256xf32> to vector<1x1x256xf32>
    %9 = math.log %8 : vector<1x1x256xf32>
    %c-100_i32 = arith.constant -100 : i32
    %10 = vector.broadcast %c-100_i32 : i32 to vector<1x1x256xi32>
    %11 = arith.cmpi ne, %1, %10 : vector<1x1x256xi32>
    %c0_i32 = arith.constant 0 : i32
    %12 = vector.broadcast %c0_i32 : i32 to vector<1x1x256xi32>
    %13 = arith.select %11, %1, %12 : vector<1x1x256xi1>, vector<1x1x256xi32>
    %14 = tpu.iota {dimensions = array<i32: 1>} : vector<1x4x256xi32>
    %15 = vector.broadcast %13 : vector<1x1x256xi32> to vector<1x4x256xi32>
    %16 = arith.cmpi eq, %14, %15 : vector<1x4x256xi32>
    %cst_6 = arith.constant 0.000000e+00 : f32
    %17 = vector.broadcast %cst_6 : f32 to vector<1x4x256xf32>
    %18 = arith.select %16, %0, %17 : vector<1x4x256xi1>, vector<1x4x256xf32>
    %cst_7 = arith.constant dense<0.000000e+00> : vector<1x256xf32>
    %19 = vector.multi_reduction <add>, %18, %cst_7 [1] : vector<1x4x256xf32> to vector<1x256xf32>
    %20 = vector.shape_cast %19 : vector<1x256xf32> to vector<1x1x256xf32>
    %21 = arith.addf %3, %9 : vector<1x1x256xf32>
    %22 = arith.subf %21, %20 : vector<1x1x256xf32>
    %cst_8 = arith.constant 4.000000e+00 : f32
    %23 = vector.broadcast %cst_8 : f32 to vector<1x1x256xf32>
    %24 = arith.mulf %23, %9 : vector<1x1x256xf32>
    %cst_9 = arith.constant dense<0.000000e+00> : vector<1x256xf32>
    %25 = vector.multi_reduction <add>, %5, %cst_9 [1] : vector<1x4x256xf32> to vector<1x256xf32>
    %26 = vector.shape_cast %25 : vector<1x256xf32> to vector<1x1x256xf32>
    %27 = arith.subf %24, %26 : vector<1x1x256xf32>
    %cst_10 = arith.constant 0.000000e+00 : f32
    %28 = vector.broadcast %cst_10 : f32 to vector<1x1x256xf32>
    %29 = arith.select %11, %22, %28 : vector<1x1x256xi1>, vector<1x1x256xf32>
    %30 = vector.shape_cast %29 : vector<1x1x256xf32> to vector<1x1x1x256xf32>
    %cst_11 = arith.constant dense<0.000000e+00> : vector<1xf32>
    %31 = vector.multi_reduction <add>, %30, %cst_11 [1, 2, 3] : vector<1x1x1x256xf32> to vector<1xf32>
    %32 = vector.shape_cast %31 : vector<1xf32> to vector<1x1x1x1xf32>
    %33 = vector.extract %32[0, 0, 0, 0] : f32 from vector<1x1x1x1xf32>
    %cst_12 = arith.constant 0.000000e+00 : f32
    %34 = vector.broadcast %cst_12 : f32 to vector<1x1x256xf32>
    %35 = arith.select %11, %27, %34 : vector<1x1x256xi1>, vector<1x1x256xf32>
    %36 = vector.shape_cast %35 : vector<1x1x256xf32> to vector<1x1x1x256xf32>
    %cst_13 = arith.constant dense<0.000000e+00> : vector<1xf32>
    %37 = vector.multi_reduction <add>, %36, %cst_13 [1, 2, 3] : vector<1x1x1x256xf32> to vector<1xf32>
    %38 = vector.shape_cast %37 : vector<1xf32> to vector<1x1x1x1xf32>
    %39 = vector.extract %38[0, 0, 0, 0] : f32 from vector<1x1x1x1xf32>
    %40 = tpu.iota {dimensions = array<i32: 3>} : vector<1x1x1x2xi32>
    %c0_i32_14 = arith.constant 0 : i32
    %41 = vector.broadcast %c0_i32_14 : i32 to vector<1x1x1x2xi32>
    %42 = arith.cmpi eq, %40, %41 : vector<1x1x1x2xi32>
    %43 = vector.broadcast %33 : f32 to vector<1x1x1x2xf32>
    %44 = vector.broadcast %39 : f32 to vector<1x1x1x2xf32>
    %45 = arith.select %42, %43, %44 : vector<1x1x1x2xi1>, vector<1x1x1x2xf32>
    %c0_15 = arith.constant 0 : index
    %c0_16 = arith.constant 0 : index
    %c0_17 = arith.constant 0 : index
    %c0_18 = arith.constant 0 : index
    %46 = vector.load %arg4[%c0_15, %c0_16, %c0_17, %c0_18] : memref<1x1x1x2xf32, #tpu.memory_space<vmem>>, vector<1x1x1x2xf32>
    tpu.vector_store %arg4[%c0_15, %c0_16, %c0_17, %c0_18], %45 {strides = array<i32>} : memref<1x1x1x2xf32, #tpu.memory_space<vmem>>, vector<1x1x1x2xf32>,
    return
  }
  func.func @transform_0(%arg0: i32, %arg1: i32) -> (i32, i32, i32) {
    %c0_i32 = arith.constant 0 : i32
    %c0_i32_0 = arith.constant 0 : i32
    return %arg0, %c0_i32, %arg1 : i32, i32, i32
  }
  func.func @transform_1(%arg0: i32, %arg1: i32) -> (i32, i32, i32) {
    %c0_i32 = arith.constant 0 : i32
    %c0_i32_0 = arith.constant 0 : i32
    return %arg0, %c0_i32, %arg1 : i32, i32, i32
  }
  func.func @transform_2(%arg0: i32, %arg1: i32) -> (i32, i32, i32, i32) {
    %c0_i32 = arith.constant 0 : i32
    %c0_i32_0 = arith.constant 0 : i32
    %c0_i32_1 = arith.constant 0 : i32
    return %arg0, %arg1, %c0_i32, %c0_i32_0 : i32, i32, i32, i32
  }
}

</mosaic_0001>

<llo_original>
// kernel: tpu_custom_call.1
$region0: #{tpu_custom_call.1}
  #allocation0 [shape = 'u32[]', space=smem, size = 0x4, offset = 0x4, fixed_abs, tag = 'smem constant byte address 0x4 - core index']
  #allocation1 [shape = 'u32[72,128]{1,0:T(1,128)}', space=vmem, size = 0x9000, scoped, tag = 'internal scratch']
  %s0 = inlined_call_operand.hbm [shape: f32[2,4,256], index: 0, kind: input, shape index: {}]
  %s1 = inlined_call_operand.hbm [shape: s32[2,1,256], index: 1, kind: input, shape index: {}]
  %s2 = inlined_call_operand.hbm [shape: f32[2,1,1,2], index: 2, kind: output, shape index: {}]
  %s3 = sld [smem:[#allocation0]]
  $region49: #{tpu_custom_call.1} parent=0
    _
  %s5 = ssub.s32 1, %s3
  %s6 = scalar_select 0, %s5, %s3
  $region1: #{tpu_custom_call.1} parent=0
    #allocation2 [shape = 'u8[8192]{0}', space=vmem, size = 0x2000, scoped, tag = 'input window, operand 0']
    #allocation3 [shape = 's32[2]{0}', space=sflag, size = 0x8, scoped, tag = 'scoped memory for tpu_custom_call.1']
    #allocation4 [shape = 's32[2]{0}', space=sflag, size = 0x8, scoped, tag = 'scoped memory for tpu_custom_call.1']
    #allocation5 [shape = 'u8[2048]{0}', space=vmem, size = 0x800, scoped, tag = 'input window, operand 1']
    #allocation6 [shape = 's32[2]{0}', space=sflag, size = 0x8, scoped, tag = 'scoped memory for tpu_custom_call.1']
    #allocation7 [shape = 'u8[1024]{0}', space=vmem, size = 0x400, scoped, tag = 'output window, operand 0']
    %7 = vsyncpa [#allocation3], 0
    %s8 = scalar_lea.sflag [#allocation3], 1
    %9 = vsyncpa %s8, 0
    %10 = vsyncpa [#allocation6], 0
    %s11 = scalar_lea.sflag [#allocation6], 1
    %12 = vsyncpa %s11, 0
    %13 = vsyncpa [#allocation4], 0
    %s14 = scalar_lea.sflag [#allocation4], 1
    %15 = vsyncpa %s14, 0
    loop: start=0, step=1, limit=4
    $region2: #{tpu_custom_call.1} parent=1 // loop_pre_header
      _
    $region3: #{tpu_custom_call.1} parent=1 // loop_header
      %s17 = sphi 0, %s21
      %p18 = scmp.ge.s32.totalorder %s17, 4
      %s24 = sphi 0, %s36
      %s25 = sphi 0, %s32
      %s26 = sphi 0, %s24
      %s27 = sphi 0, %s25
      %s28 = sphi 0, %s26
      %s29 = sphi 0, %s27
      %s41 = sphi 0, %s43
      %s44 = sphi 0, %s41
      %s45 = sphi 0, %s44
      %s61 = sphi 0, %s45
      %s69 = sphi 0, %s71
      %s72 = sphi 0, %s69
      %s73 = sphi 0, %s72
      %s89 = sphi 0, %s73
      %s97 = sphi 0, %s99
      %s100 = sphi 0, %s97
      %s101 = sphi 0, %s100
      %s117 = sphi 0, %s101
    $region4: #{tpu_custom_call.1} parent=1 // loop_header_branch
      %20 = sbr.rel (%p18) target = $region8
    $region5: #{tpu_custom_call.1} parent=1 // loop_body
      %s22 = ssub.s32 %s17, 1
      %s23 = ssub.s32 %s17, 2
      %s30 = sadd.s32 1, %s25
      %p31 = scmp.ge.s32.totalorder %s30, 1
      %s32 = scalar_select %p31, 0, %s30
      %s33 = sadd.s32 1, %s24
      %s34 = scalar_select %p31, %s33, %s24
      %p35 = scmp.ge.s32.totalorder %s34, 2
      %s36 = scalar_select %p35, 0, %s34
      %s37 = ssub.s32 %s24, %s36
      %s38 = ssub.s32 %s25, %s32
      %s39 = sor.u32 %s37, %s38
      %p40 = scmp.eq.s32.totalorder %s39, 0
      %s42 = sadd.s32 %s41, 1
      %s43 = scalar_select %p40, %s41, %s42
      %p46 = pneg %p40
      %p47 = scmp.eq.s32.totalorder %s17, 1
      %p48 = por %p46, %p47
      %p49 = scmp.ne.s32.totalorder %s41, %s44
      %p50 = scmp.eq.s32.totalorder %s17, 0
      %p51 = por %p49, %p50
      %p52 = scmp.ne.s32.totalorder %s41, %s44
      %p53 = scmp.eq.s32.totalorder %s22, 1
      %p54 = por %p52, %p53
      %p55 = scmp.ne.s32.totalorder %s44, %s45
      %p56 = scmp.eq.s32.totalorder %s22, 0
      %p57 = por %p55, %p56
      %p58 = scmp.ne.s32.totalorder %s44, %s45
      %p59 = scmp.eq.s32.totalorder %s23, 1
      %p60 = por %p58, %p59
      %p62 = scmp.ne.s32.totalorder %s45, %s61
      %p63 = scmp.eq.s32.totalorder %s23, 0
      %p64 = por %p62, %p63
      %s65 = ssub.s32 %s24, %s36
      %s66 = ssub.s32 %s25, %s32
      %s67 = sor.u32 %s65, %s66
      %p68 = scmp.eq.s32.totalorder %s67, 0
      %s70 = sadd.s32 %s69, 1
      %s71 = scalar_select %p68, %s69, %s70
      %p74 = pneg %p68
      %p75 = scmp.eq.s32.totalorder %s17, 1
      %p76 = por %p74, %p75
      %p77 = scmp.ne.s32.totalorder %s69, %s72
      %p78 = scmp.eq.s32.totalorder %s17, 0
      %p79 = por %p77, %p78
      %p80 = scmp.ne.s32.totalorder %s69, %s72
      %p81 = scmp.eq.s32.totalorder %s22, 1
      %p82 = por %p80, %p81
      %p83 = scmp.ne.s32.totalorder %s72, %s73
      %p84 = scmp.eq.s32.totalorder %s22, 0
      %p85 = por %p83, %p84
      %p86 = scmp.ne.s32.totalorder %s72, %s73
      %p87 = scmp.eq.s32.totalorder %s23, 1
      %p88 = por %p86, %p87
      %p90 = scmp.ne.s32.totalorder %s73, %s89
      %p91 = scmp.eq.s32.totalorder %s23, 0
      %p92 = por %p90, %p91
      %s93 = ssub.s32 %s24, %s36
      %s94 = ssub.s32 %s25, %s32
      %s95 = sor.u32 %s93, %s94
      %p96 = scmp.eq.s32.totalorder %s95, 0
      %s98 = sadd.s32 %s97, 1
      %s99 = scalar_select %p96, %s97, %s98
      %p102 = pneg %p96
      %p103 = scmp.eq.s32.totalorder %s17, 1
      %p104 = por %p102, %p103
      %p105 = scmp.ne.s32.totalorder %s97, %s100
      %p106 = scmp.eq.s32.totalorder %s17, 0
      %p107 = por %p105, %p106
      %p108 = scmp.ne.s32.totalorder %s97, %s100
      %p109 = scmp.eq.s32.totalorder %s22, 1
      %p110 = por %p108, %p109
      %p111 = scmp.ne.s32.totalorder %s100, %s101
      %p112 = scmp.eq.s32.totalorder %s22, 0
      %p113 = por %p111, %p112
      %p114 = scmp.ne.s32.totalorder %s100, %s101
      %p115 = scmp.eq.s32.totalorder %s23, 1
      %p116 = por %p114, %p115
      %p118 = scmp.ne.s32.totalorder %s101, %s117
      %p119 = scmp.eq.s32.totalorder %s23, 0
      %p120 = por %p118, %p119
      %p121 = scmp.le.s32.totalorder 1, %s17
      %p122 = scmp.lt.s32.totalorder %s17, 3
      %p123 = pnand %p121, %p122
      %p124 = pneg %p123
      // Predicated region
      $region9: #{tpu_custom_call.1} parent=5 // pred_check
        _
      $region10: #{tpu_custom_call.1} parent=5 // pred_check_branch
        %126 = sbr.rel (%p123) target = $region12
      $region11: #{tpu_custom_call.1} parent=5 // pred_region
        %s127 = ssub.s32 %s17, 1
      $region12: #{tpu_custom_call.1} parent=5 // pred_fallthru
        _
      %p128 = scmp.lt.s32.totalorder %s17, 2
      // Predicated region
      $region13: #{tpu_custom_call.1} parent=5 // pred_check
        %p129 = pneg %p128
      $region14: #{tpu_custom_call.1} parent=5 // pred_check_branch
        %131 = sbr.rel (%p129) target = $region16
      $region15: #{tpu_custom_call.1} parent=5 // pred_region
        // Predicated region
        $region17: #{tpu_custom_call.1} parent=15 // pred_check
          %p132 = pneg %p51
        $region18: #{tpu_custom_call.1} parent=15 // pred_check_branch
          %134 = sbr.rel (%p132) target = $region20
        $region19: #{tpu_custom_call.1} parent=15 // pred_region
          %s135 = sand.u32 %s41, 1
          %s136 = scalar_lea.sflag [#allocation3], %s135
          %s137 = sand.u32 %s41, 1
          %s138 = smul.addr %s137, 8
          %s139 = scalar_lea.vmem [#allocation2], %s138
          %s140 = smul.u32 2, %s25
          %142 = vsyncadd %s136, 0
          %s143 = smul.addr %s24, 2
          %s144 = sadd.s32 %s140, %s143
          %s145 = smul.addr %s144, 4
          %s146 = scalar_lea.hbm %s0, %s145
          %s148 = sshll.u32 %s146, 4
          %s149 = int_to_ptr.hbm [resolvable:$true] %s148
          %s150 = sshll.u32 %s139, 4
          %s151 = int_to_ptr.vmem [resolvable:$true] %s150
          %153 = dma.hbm_to_vmem [thread:$0]  %s149, 128, %s151, %s136
        $region20: #{tpu_custom_call.1} parent=15 // pred_fallthru
          _
        // Predicated region
        $region21: #{tpu_custom_call.1} parent=15 // pred_check
          %p154 = pneg %p79
        $region22: #{tpu_custom_call.1} parent=15 // pred_check_branch
          %156 = sbr.rel (%p154) target = $region24
        $region23: #{tpu_custom_call.1} parent=15 // pred_region
          %s157 = sand.u32 %s69, 1
          %s158 = scalar_lea.sflag [#allocation6], %s157
          %s159 = sand.u32 %s69, 1
          %s160 = smul.addr %s159, 2
          %s161 = scalar_lea.vmem [#allocation5], %s160
          %s162 = smul.u32 2, %s25
          %164 = vsyncadd %s158, 0
          %s165 = smul.addr %s24, 2
          %s166 = sadd.s32 %s162, %s165
          %s167 = scalar_lea.hbm %s1, %s166
          %s169 = sshll.u32 %s167, 4
          %s170 = int_to_ptr.hbm [resolvable:$true] %s169
          %s171 = sshll.u32 %s161, 4
          %s172 = int_to_ptr.vmem [resolvable:$true] %s171
          %174 = dma.hbm_to_vmem [thread:$0]  %s170, 32, %s172, %s158
        $region24: #{tpu_custom_call.1} parent=15 // pred_fallthru
          _
      $region16: #{tpu_custom_call.1} parent=5 // pred_fallthru
        _
      %p175 = scmp.le.s32.totalorder 1, %s17
      %p176 = scmp.lt.s32.totalorder %s17, 3
      %p177 = pnand %p175, %p176
      %p178 = pneg %p177
      // Predicated region
      $region25: #{tpu_custom_call.1} parent=5 // pred_check
        _
      $region26: #{tpu_custom_call.1} parent=5 // pred_check_branch
        %180 = sbr.rel (%p177) target = $region28
      $region27: #{tpu_custom_call.1} parent=5 // pred_region
        %s181 = ssub.s32 %s17, 1
        %s182 = sand.u32 %s44, 1
        %s183 = scalar_lea.sflag [#allocation3], %s182
        %s184 = sand.u32 %s44, 1
        %s185 = smul.addr %s184, 8
        %s186 = scalar_lea.vmem [#allocation2], %s185
        // Predicated region
        $region29: #{tpu_custom_call.1} parent=27 // pred_check
          %p187 = pneg %p57
        $region30: #{tpu_custom_call.1} parent=27 // pred_check_branch
          %189 = sbr.rel (%p187) target = $region32
        $region31: #{tpu_custom_call.1} parent=27 // pred_region
          %191 = dma.done %s183, 128
        $region32: #{tpu_custom_call.1} parent=27 // pred_fallthru
          _
        %s192 = sand.u32 %s72, 1
        %s193 = scalar_lea.sflag [#allocation6], %s192
        %s194 = sand.u32 %s72, 1
        %s195 = smul.addr %s194, 2
        %s196 = scalar_lea.vmem [#allocation5], %s195
        // Predicated region
        $region33: #{tpu_custom_call.1} parent=27 // pred_check
          %p197 = pneg %p85
        $region34: #{tpu_custom_call.1} parent=27 // pred_check_branch
          %199 = sbr.rel (%p197) target = $region36
        $region35: #{tpu_custom_call.1} parent=27 // pred_region
          %201 = dma.done %s193, 32
        $region36: #{tpu_custom_call.1} parent=27 // pred_fallthru
          _
        %s202 = sand.u32 %s44, 1
        %s203 = scalar_lea.sflag [#allocation3], %s202
        %s204 = sand.u32 %s44, 1
        %s205 = smul.addr %s204, 8
        %s206 = scalar_lea.vmem [#allocation2], %s205
        %p207 = pneg %p57
        %p208 = pneg %p54
        %s209 = sand.u32 %s72, 1
        %s210 = scalar_lea.sflag [#allocation6], %s209
        %s211 = sand.u32 %s72, 1
        %s212 = smul.addr %s211, 2
        %s213 = scalar_lea.vmem [#allocation5], %s212
        %p214 = pneg %p85
        %p215 = pneg %p82
        %p216 = pneg %p113
        %p217 = pneg %p110
        %s218 = sand.u32 %s100, 1
        %s219 = scalar_lea.sflag [#allocation4], %s218
        %s220 = sand.u32 %s100, 1
        %s221 = scalar_lea.vmem [#allocation7], %s220
        %s222 = smul.u32 2, %s27
        %s223 = smul.u32 2, %s27
        %v224 = vld [vmem:[%s186] sm:$0xff]
        %v225 = vld [vmem:[%s196] sm:$0x3]
        %227 = vst [vmem:[#allocation1] ss:$2 sm:$0xff] %v224
        %v228 = vld.sshfl [vmem:[#allocation1] sm:$0xff pattern:$0x75316420]
        %v229 = vld.sshfl [vmem:[#allocation1 + $0x8] sm:$0xff pattern:$0x75316420]
        %vm232 = vcmask 1043456
        %v233 = vsel %vm232, %v228, -inf
        %v234 = vrot.slane %v233, 4
        %v235 = vmax.f32 %v233, %v234
        %v236 = vrot.slane %v235, 2
        %v237 = vmax.f32 %v235, %v236
        %v238 = vrot.slane %v237, 1
        %v239 = vmax.f32 %v237, %v238
        %v240 = vsel %vm232, %v229, -inf
        %v241 = vrot.slane %v240, 4
        %v242 = vmax.f32 %v240, %v241
        %v243 = vrot.slane %v242, 2
        %v244 = vmax.f32 %v242, %v243
        %v245 = vrot.slane %v244, 1
        %v246 = vmax.f32 %v244, %v245
        %v249 = vrot.slane %v246, 4
        %v250 = vsel %vm232, %v239, %v249
        %v252 = vsub.f32 %v224, %v250
        %v253 = vmul.f32 %v252, 1.442695
        %v254 = vpow.pop %v253
        %256 = vst [vmem:[#allocation1] ss:$2 sm:$0xff] %v254
        %v257 = vld.sshfl [vmem:[#allocation1] sm:$0xff pattern:$0x75316420]
        %v258 = vld.sshfl [vmem:[#allocation1 + $0x8] sm:$0xff pattern:$0x75316420]
        %v261 = vsel %vm232, %v257, 0.0
        %v262 = vrot.slane %v261, 4
        %v263 = vadd.f32 %v261, %v262
        %v264 = vrot.slane %v263, 2
        %v265 = vadd.f32 %v263, %v264
        %v266 = vrot.slane %v265, 1
        %v267 = vadd.f32 %v265, %v266
        %v268 = vsel %vm232, %v258, 0.0
        %v269 = vrot.slane %v268, 4
        %v270 = vadd.f32 %v268, %v269
        %v271 = vrot.slane %v270, 2
        %v272 = vadd.f32 %v270, %v271
        %v273 = vrot.slane %v272, 1
        %v274 = vadd.f32 %v272, %v273
        %v275 = vlog2.pop %v267
        %v276 = vmul.f32 %v275, 0.6931472
        %v277 = vlog2.pop %v274
        %v278 = vmul.f32 %v277, 0.6931472
        %vm279 = vcmp.ne.s32.totalorder %v225, 4294967196
        %v280 = vsel %vm279, %v225, 0
        %v281 = vlaneseq
        %v282 = vshrl.u32 %v281, 7
        %v283 = vperm.slane %v280, 0
        %v284 = vperm.slane %v280, 1
        %vm285 = vcmp.eq.s32.totalorder %v282, %v283
        %vm286 = vcmp.eq.s32.totalorder %v282, %v284
        %287 = vst [vmem:[#allocation1] ss:$2 sm:$0xff] %v224
        %v288 = vld.sshfl [vmem:[#allocation1] sm:$0xff pattern:$0x75316420]
        %v289 = vld.sshfl [vmem:[#allocation1 + $0x8] sm:$0xff pattern:$0x75316420]
        %v292 = vsel %vm285, %v288, 0.0
        %v293 = vsel %vm286, %v289, 0.0
        %v294 = vsel %vm232, %v292, 0.0
        %v295 = vrot.slane %v294, 4
        %v296 = vadd.f32 %v294, %v295
        %v297 = vrot.slane %v296, 2
        %v298 = vadd.f32 %v296, %v297
        %v299 = vrot.slane %v298, 1
        %v300 = vadd.f32 %v298, %v299
        %v301 = vsel %vm232, %v293, 0.0
        %v302 = vrot.slane %v301, 4
        %v303 = vadd.f32 %v301, %v302
        %v304 = vrot.slane %v303, 2
        %v305 = vadd.f32 %v303, %v304
        %v306 = vrot.slane %v305, 1
        %v307 = vadd.f32 %v305, %v306
        %v308 = vadd.f32 %v239, %v276
        %v309 = vadd.f32 %v246, %v278
        %v310 = vsub.f32 %v308, %v300
        %v311 = vsub.f32 %v309, %v307
        %v312 = vmul.f32 %v276, 4.0
        %v313 = vmul.f32 %v278, 4.0
        %315 = vst [vmem:[#allocation1] ss:$2 sm:$0xff] %v252
        %v316 = vld.sshfl [vmem:[#allocation1] sm:$0xff pattern:$0x75316420]
        %v317 = vld.sshfl [vmem:[#allocation1 + $0x8] sm:$0xff pattern:$0x75316420]
        %v320 = vsel %vm232, %v316, 0.0
        %v321 = vrot.slane %v320, 4
        %v322 = vadd.f32 %v320, %v321
        %v323 = vrot.slane %v322, 2
        %v324 = vadd.f32 %v322, %v323
        %v325 = vrot.slane %v324, 1
        %v326 = vadd.f32 %v324, %v325
        %v327 = vsel %vm232, %v317, 0.0
        %v328 = vrot.slane %v327, 4
        %v329 = vadd.f32 %v327, %v328
        %v330 = vrot.slane %v329, 2
        %v331 = vadd.f32 %v329, %v330
        %v332 = vrot.slane %v331, 1
        %v333 = vadd.f32 %v331, %v332
        %v334 = vsub.f32 %v312, %v326
        %v335 = vsub.f32 %v313, %v333
        %v338 = vrot.slane %v311, 7
        %vm339 = vcmask 1040384
        %v340 = vsel %vm339, %v310, %v338
        %v342 = vsel %vm279, %v340, 0.0
        %v344 = vperm.slane %v342, 0
        %v345 = vperm.slane %v342, 1
        %v348 = vsel %vm339, %v344, 0.0
        %v349 = vsel %vm339, %v345, 0.0
        %v350 = vadd.f32 %v348, %v349
        %351 = vadd.xlane.f32.xlu0 %v350
        %v352 = vpop.xlane.xlu0 %351
        %v353 = vrot.slane %v352, 4
        %v354 = vadd.f32 %v352, %v353
        %v355 = vrot.slane %v354, 2
        %v356 = vadd.f32 %v354, %v355
        %v357 = vrot.slane %v356, 1
        %v358 = vadd.f32 %v356, %v357
        %s359 = vtos %v358
        %v362 = vrot.slane %v335, 7
        %v363 = vsel %vm339, %v334, %v362
        %v365 = vsel %vm279, %v363, 0.0
        %v367 = vperm.slane %v365, 0
        %v368 = vperm.slane %v365, 1
        %v371 = vsel %vm339, %v367, 0.0
        %v372 = vsel %vm339, %v368, 0.0
        %v373 = vadd.f32 %v371, %v372
        %374 = vadd.xlane.f32.xlu0 %v373
        %v375 = vpop.xlane.xlu0 %374
        %v376 = vrot.slane %v375, 4
        %v377 = vadd.f32 %v375, %v376
        %v378 = vrot.slane %v377, 2
        %v379 = vadd.f32 %v377, %v378
        %v380 = vrot.slane %v379, 1
        %v381 = vadd.f32 %v379, %v380
        %s382 = vtos %v381
        %v383 = vlaneseq
        %v384 = vand.u32 %v383, 127
        %vm385 = vcmp.eq.s32.totalorder %v384, 0
        %v386 = vstv %s359
        %v387 = vstv %s382
        %v388 = vsel %vm385, %v386, %v387
        %vm389 = vcmask 8192
        %390 = vst.msk [vmem:[%s221] sm:$0x1] %vm389, %v388
        %s391 = sand.u32 %s100, 1
        %s392 = scalar_lea.sflag [#allocation4], %s391
        %s393 = sand.u32 %s100, 1
        %s394 = scalar_lea.vmem [#allocation7], %s393
        // Predicated region
        $region37: #{tpu_custom_call.1} parent=27 // pred_check
          %p395 = pneg %p110
        $region38: #{tpu_custom_call.1} parent=27 // pred_check_branch
          %397 = sbr.rel (%p395) target = $region40
        $region39: #{tpu_custom_call.1} parent=27 // pred_region
          %399 = vsyncadd %s392, 0
          %s400 = sadd.s32 %s27, %s26
          %s401 = scalar_lea.hbm %s2, %s400
          %s403 = sshll.u32 %s394, 4
          %s404 = int_to_ptr.vmem [resolvable:$true] %s403
          %s405 = sshll.u32 %s401, 4
          %s406 = int_to_ptr.hbm [resolvable:$true] %s405
          %408 = dma.vmem_to_hbm [thread:$0]  %s404, 16, %s406, %s392
        $region40: #{tpu_custom_call.1} parent=27 // pred_fallthru
          _
      $region28: #{tpu_custom_call.1} parent=5 // pred_fallthru
        _
      %p409 = scmp.le.s32.totalorder 2, %s17
      // Predicated region
      $region41: #{tpu_custom_call.1} parent=5 // pred_check
        %p410 = pneg %p409
      $region42: #{tpu_custom_call.1} parent=5 // pred_check_branch
        %412 = sbr.rel (%p410) target = $region44
      $region43: #{tpu_custom_call.1} parent=5 // pred_region
        %s413 = ssub.s32 %s17, 2
        // Predicated region
        $region45: #{tpu_custom_call.1} parent=43 // pred_check
          %p414 = pneg %p116
        $region46: #{tpu_custom_call.1} parent=43 // pred_check_branch
          %416 = sbr.rel (%p414) target = $region48
        $region47: #{tpu_custom_call.1} parent=43 // pred_region
          %s417 = sand.u32 %s101, 1
          %s418 = scalar_lea.sflag [#allocation4], %s417
          %s419 = sand.u32 %s101, 1
          %s420 = scalar_lea.vmem [#allocation7], %s419
          %422 = dma.done %s418, 16
        $region48: #{tpu_custom_call.1} parent=43 // pred_fallthru
          _
      $region44: #{tpu_custom_call.1} parent=5 // pred_fallthru
        _
    $region6: #{tpu_custom_call.1} parent=1 // loop_footer
      %s21 = sadd.s32 1, %s17
    $region7: #{tpu_custom_call.1} parent=1 // loop_footer_branch
      %16 = sbr.rel target = $region3
    $region8: #{tpu_custom_call.1} parent=1 // loop_exit
      _
    %423 = vsyncpa [#allocation3], 1
    %s424 = scalar_lea.sflag [#allocation3], 1
    %425 = vsyncpa %s424, 1
    %426 = vsyncpa [#allocation6], 1
    %s427 = scalar_lea.sflag [#allocation6], 1
    %428 = vsyncpa %s427, 1
    %429 = vsyncpa [#allocation4], 1
    %s430 = scalar_lea.sflag [#allocation4], 1
    %431 = vsyncpa %s430, 1

</llo_original>
